<compile_context>
chip_gen: v6e
topology: v6e:2x2x1
jax: 0.10.0
libtpu: 0.0.40
codegen_flags: <defaults>
</compile_context>

<pallas_src>
import math

import jax
import jax.numpy as jnp
from jax import lax
from jax.experimental import pallas as pl
from jax.experimental.pallas import tpu as pltpu

# ---- static config (small shapes consistent with the module) ----------------
B = 2      # batch
T = 8      # sequence length
D = 32     # embedding dim (head dim == D in this module)
H = 4      # number of heads
MASK = False   # SelfAttention(mask=...) constructor flag (causal mask)
EPS = 1e-5     # nn.LayerNorm default eps

BT = B * T
HD = H * D
FF = 4 * D


def transformer_block_kernel(
    x_ref,        # (B*T, D)              f32   all batch elements, row-stacked
    wslab_ref,    # (D, 3*H*D + 4*D)      bf16  [Wq*scale | Wk | Wv@Wu | W1']
    w2_ref,       # (4D, D)               bf16  FF linear 2
    pv_ref,       # (8+BT, 4D)            f32   small params + precomputed mask
    o_ref,        # (B*T, D)
):
    x = x_ref[...].astype(jnp.float32)                  # (BT, D)
    x_bf = x.astype(jnp.bfloat16)

    # --- unpack the consolidated small-parameter / mask slab -------------------
    pv = pv_ref[...]                                    # (8+BT, 4D) f32
    bu  = pv[0:1, :D]
    g1  = pv[1:2, :D]
    be1 = pv[2:3, :D]
    b1  = pv[3:4, :]                                    # (1, 4D) (already LN1-folded)
    b2  = pv[4:5, :D]
    g2  = pv[5:6, :D]
    be2 = pv[6:7, :D]
    neg = pv[8:8 + BT, :BT]                             # (BT, BT) additive mask

    ws = wslab_ref[...]                                 # (D, 3HD+4D) bf16
    wqkv = ws[:, :3 * HD]
    w1 = ws[:, 3 * HD:]

    # --- fused QKV projection: one bf16 MXU matmul, f32 accumulate -------------
    # 1/sqrt(D) folded into Wq, unify folded into Wv' at pack time.
    qkv = jnp.dot(x_bf, wqkv, preferred_element_type=jnp.float32)   # (BT, 3HD)

    q_bf = qkv[:, 0:HD].astype(jnp.bfloat16)
    k_bf = qkv[:, HD:2 * HD].astype(jnp.bfloat16)
    v_bf = qkv[:, 2 * HD:3 * HD].astype(jnp.bfloat16)   # already unify-projected

    # --- attention: heads unrolled, both batch elements handled at once --------
    att = jnp.zeros((BT, D), jnp.float32)
    for h in range(H):
        sl = slice(h * D, (h + 1) * D)
        s = lax.dot_general(q_bf[:, sl], k_bf[:, sl], (((1,), (1,)), ((), ())),
                            preferred_element_type=jnp.float32) + neg  # (BT, BT)
        s = s - jnp.max(s, axis=-1, keepdims=True)
        p = jnp.exp(s)
        p = p * pl.reciprocal(jnp.sum(p, axis=-1, keepdims=True), approx=True)
        att = att + jnp.dot(p.astype(jnp.bfloat16), v_bf[:, sl],
                            preferred_element_type=jnp.float32)         # (BT, D)
    att = att + bu

    # --- residual + LayerNorm 1 (affine kept only for the residual stream) -----
    x1 = att + x
    mu1 = jnp.mean(x1, axis=-1, keepdims=True)
    var1 = jnp.mean((x1 - mu1) ** 2, axis=-1, keepdims=True)
    xhat1 = (x1 - mu1) * lax.rsqrt(var1 + EPS)
    xn1 = xhat1 * g1 + be1                               # off the FF critical path

    # --- feed-forward: LN1 affine folded into W1'/b1', bf16 MXU operands -------
    hmid = jnp.dot(xhat1.astype(jnp.bfloat16), w1,
                   preferred_element_type=jnp.float32) + b1
    hmid = jnp.maximum(hmid, 0.0)
    ff = jnp.dot(hmid.astype(jnp.bfloat16), w2_ref[...],
                 preferred_element_type=jnp.float32) + b2

    # --- residual + LayerNorm 2 -------------------------------------------------
    x2 = ff + xn1
    mu2 = jnp.mean(x2, axis=-1, keepdims=True)
    var2 = jnp.mean((x2 - mu2) ** 2, axis=-1, keepdims=True)
    o_ref[...] = ((x2 - mu2) * lax.rsqrt(var2 + EPS) * g2 + be2).astype(o_ref.dtype)


def pack_params(p):
    """One-time repacking: fold scale/unify/LN1-affine into weights, cast bf16,
    consolidate weights into one slab and small params + mask into another."""
    bf = jnp.bfloat16
    scale = 1.0 / math.sqrt(D)

    # fold 1/sqrt(D) into Wq
    wq_s = p["wq"] * scale                                            # (D, HD)
    # fold unify into V per head (f32 product, single bf16 cast later)
    wv_folded = jnp.concatenate(
        [p["wv"][:, h * D:(h + 1) * D] @ p["wu"][h * D:(h + 1) * D, :]
         for h in range(H)], axis=1)                                  # (D, HD)
    wqkv = jnp.concatenate([wq_s, p["wk"], wv_folded], axis=1)        # (D, 3HD)

    # fold LN1 affine into FF1
    w1_f = p["g1"].reshape(D, 1) * p["w1"]                            # diag(g1)@W1
    b1_f = p["be1"] @ p["w1"] + p["b1"]                               # (1, 4D)

    wslab = jnp.concatenate([wqkv, w1_f], axis=1).astype(bf)          # (D, 3HD+4D)

    def row(vec):   # pad a (1, n) param row out to (1, 4D)
        return jnp.pad(vec, ((0, 0), (0, FF - vec.shape[1])))

    small = jnp.concatenate(
        [row(p["bu"]), row(p["g1"]), row(p["be1"]), row(b1_f),
         row(p["b2"]), row(p["g2"]), row(p["be2"]),
         jnp.zeros((1, FF), jnp.float32)], axis=0)                    # (8, 4D)

    # precomputed additive mask: block-diagonal over batch (+ causal if MASK)
    ri = lax.broadcasted_iota(jnp.int32, (BT, BT), 0)
    ci = lax.broadcasted_iota(jnp.int32, (BT, BT), 1)
    disallow = (ri // T) != (ci // T)
    if MASK:
        disallow = jnp.logical_or(disallow, ci > ri)
    neg = jnp.where(disallow, -1e30, 0.0).astype(jnp.float32)         # (BT, BT)
    neg = jnp.pad(neg, ((0, 0), (0, FF - BT)))                        # (BT, 4D)

    pv = jnp.concatenate([small, neg], axis=0).astype(jnp.float32)    # (8+BT, 4D)

    return {"wslab": wslab, "w2": p["w2"].astype(bf), "pv": pv}


def transformer_block(x, packed):
    """x: (B, T, D) float32.  packed: output of pack_params()."""
    x2d = x.reshape(BT, D)

    full = lambda shape: pl.BlockSpec(shape, lambda i: (0,) * len(shape))

    out = pl.pallas_call(
        transformer_block_kernel,
        out_shape=jax.ShapeDtypeStruct((BT, D), x.dtype),
        grid=(1,),
        in_specs=[
            full((BT, D)),               # x (whole batch, row-stacked)
            full((D, 3 * HD + FF)),      # fused [Wq*scale | Wk | Wv@Wu | W1'] bf16
            full((FF, D)),               # ff2 weight bf16
            full((8 + BT, FF)),          # packed small params + additive mask
        ],
        out_specs=full((BT, D)),
        compiler_params=pltpu.CompilerParams(
            dimension_semantics=("arbitrary",)),
    )(x2d, packed["wslab"], packed["w2"], packed["pv"])

    return out.reshape(B, T, D)


def init_params(key):
    """Deterministic synthetic weights matching the PyTorch module's shapes."""
    ks = jax.random.split(key, 8)
    s = 0.05
    p = {
        # nn.Linear(d, d*h, bias=False)  -> stored transposed (in, out)
        "wq": jax.random.normal(ks[0], (D, HD), jnp.float32) * s,
        "wk": jax.random.normal(ks[1], (D, HD), jnp.float32) * s,
        "wv": jax.random.normal(ks[2], (D, HD), jnp.float32) * s,
        # nn.Linear(d*h, d)
        "wu": jax.random.normal(ks[3], (HD, D), jnp.float32) * s,
        "bu": jax.random.normal(ks[4], (1, D), jnp.float32) * s,
        # nn.LayerNorm(d) default init: weight=1, bias=0
        "g1": jnp.ones((1, D), jnp.float32),
        "be1": jnp.zeros((1, D), jnp.float32),
        # nn.Linear(d, 4d), nn.Linear(4d, d)
        "w1": jax.random.normal(ks[5], (D, FF), jnp.float32) * s,
        "b1": jax.random.normal(ks[6], (1, FF), jnp.float32) * s,
        "w2": jax.random.normal(ks[7], (FF, D), jnp.float32) * s,
        "b2": jnp.zeros((1, D), jnp.float32),
        "g2": jnp.ones((1, D), jnp.float32),
        "be2": jnp.zeros((1, D), jnp.float32),
    }
    return p


def reference_forward(x, p):
    """Pure-JAX f32 reference reproducing the PyTorch forward exactly."""
    b, t, e = x.shape
    q = x @ p["wq"]
    k = x @ p["wk"]
    v = x @ p["wv"]
    q = q.reshape(b, t, H, e).transpose(0, 2, 1, 3)
    k = k.reshape(b, t, H, e).transpose(0, 2, 1, 3)
    v = v.reshape(b, t, H, e).transpose(0, 2, 1, 3)
    dot = jnp.einsum("bhqe,bhke->bhqk", q, k) / math.sqrt(e)
    if MASK:
        row = lax.broadcasted_iota(jnp.int32, (t, t), 0)
        col = lax.broadcasted_iota(jnp.int32, (t, t), 1)
        dot = jnp.where(col > row, -jnp.inf, dot)
    dot = jax.nn.softmax(dot, axis=-1)
    out = jnp.einsum("bhqk,bhke->bhqe", dot, v)
    out = out.transpose(0, 2, 1, 3).reshape(b, t, H * e)
    att = out @ p["wu"] + p["bu"]

    def ln(z, g, bb):
        mu = jnp.mean(z, axis=-1, keepdims=True)
        var = jnp.mean((z - mu) ** 2, axis=-1, keepdims=True)
        return (z - mu) * lax.rsqrt(var + EPS) * g + bb

    x1 = ln(att + x, p["g1"], p["be1"])
    ff = jnp.maximum(x1 @ p["w1"] + p["b1"], 0.0) @ p["w2"] + p["b2"]
    return ln(ff + x1, p["g2"], p["be2"])


if __name__ == "__main__":
    key = jax.random.PRNGKey(0)
    kx, kp = jax.random.split(key)
    x = jax.random.normal(kx, (B, T, D), jnp.float32)
    params = init_params(kp)
    packed = pack_params(params)

    out = transformer_block(x, packed)
    out = jax.block_until_ready(out)

    ref = reference_forward(x, params)
    assert out.shape == (B, T, D)
    # bf16 MXU operands + approx softmax reciprocal -> relaxed tolerance vs f32 ref.
    assert jnp.allclose(out, ref, atol=2e-2, rtol=2e-2), "mismatch vs reference"

    print("KERNEL_OK")
</pallas_src>

<mosaic_0001>
module attributes {stable_mosaic.version = 11 : i64} {
  func.func @transformer_block_kernel(%arg0: i32, %arg1: memref<16x32xf32, #tpu.memory_space<vmem>>, %arg2: memref<32x512xbf16, #tpu.memory_space<vmem>>, %arg3: memref<128x32xbf16, #tpu.memory_space<vmem>>, %arg4: memref<24x128xf32, #tpu.memory_space<vmem>>, %arg5: memref<16x32xf32, #tpu.memory_space<vmem>>) attributes {dimension_semantics = [#tpu.dimension_semantics<arbitrary>], iteration_bounds = array<i64: 1>, scalar_prefetch = 0 : i64, scratch_operands = 0 : i64, tpu.core_type = #tpu.core_type<tc>, window_params = [{pipeline_mode = #tpu.pipeline_mode<synchronous>, transform_indices = @transform_0, window_bounds = array<i64: 16, 32>}, {pipeline_mode = #tpu.pipeline_mode<synchronous>, transform_indices = @transform_1, window_bounds = array<i64: 32, 512>}, {pipeline_mode = #tpu.pipeline_mode<synchronous>, transform_indices = @transform_2, window_bounds = array<i64: 128, 32>}, {pipeline_mode = #tpu.pipeline_mode<synchronous>, transform_indices = @transform_3, window_bounds = array<i64: 24, 128>}, {pipeline_mode = #tpu.pipeline_mode<synchronous>, transform_indices = @transform_4, window_bounds = array<i64: 16, 32>}]} {
    %c0 = arith.constant 0 : index
    %c0_0 = arith.constant 0 : index
    %0 = vector.load %arg1[%c0, %c0_0] : memref<16x32xf32, #tpu.memory_space<vmem>>, vector<16x32xf32>
    %1 = arith.truncf %0 : vector<16x32xf32> to vector<16x32xbf16>
    %c0_1 = arith.constant 0 : index
    %c0_2 = arith.constant 0 : index
    %2 = vector.load %arg4[%c0_1, %c0_2] : memref<24x128xf32, #tpu.memory_space<vmem>>, vector<24x128xf32>
    %3 = vector.extract_strided_slice %2 {offsets = [0, 0], sizes = [1, 32], strides = [1, 1]} : vector<24x128xf32> to vector<1x32xf32>
    %4 = vector.extract_strided_slice %2 {offsets = [1, 0], sizes = [1, 32], strides = [1, 1]} : vector<24x128xf32> to vector<1x32xf32>
    %5 = vector.extract_strided_slice %2 {offsets = [2, 0], sizes = [1, 32], strides = [1, 1]} : vector<24x128xf32> to vector<1x32xf32>
    %6 = vector.extract_strided_slice %2 {offsets = [3, 0], sizes = [1, 128], strides = [1, 1]} : vector<24x128xf32> to vector<1x128xf32>
    %7 = vector.extract_strided_slice %2 {offsets = [4, 0], sizes = [1, 32], strides = [1, 1]} : vector<24x128xf32> to vector<1x32xf32>
    %8 = vector.extract_strided_slice %2 {offsets = [5, 0], sizes = [1, 32], strides = [1, 1]} : vector<24x128xf32> to vector<1x32xf32>
    %9 = vector.extract_strided_slice %2 {offsets = [6, 0], sizes = [1, 32], strides = [1, 1]} : vector<24x128xf32> to vector<1x32xf32>
    %10 = vector.extract_strided_slice %2 {offsets = [8, 0], sizes = [16, 16], strides = [1, 1]} : vector<24x128xf32> to vector<16x16xf32>
    %c0_3 = arith.constant 0 : index
    %c0_4 = arith.constant 0 : index
    %11 = vector.load %arg2[%c0_3, %c0_4] : memref<32x512xbf16, #tpu.memory_space<vmem>>, vector<32x512xbf16>
    %12 = vector.extract_strided_slice %11 {offsets = [0, 0], sizes = [32, 384], strides = [1, 1]} : vector<32x512xbf16> to vector<32x384xbf16>
    %13 = vector.extract_strided_slice %11 {offsets = [0, 384], sizes = [32, 128], strides = [1, 1]} : vector<32x512xbf16> to vector<32x128xbf16>
    %cst = arith.constant dense<0.000000e+00> : vector<16x384xf32>
    %14 = tpu.matmul %1, %12, %cst {dimension_numbers = #tpu.dot_dimension_numbers<[1], [0], [0], [1], [0, 0, 1, 1], [], []>} : vector<16x32xbf16>, vector<32x384xbf16>, vector<16x384xf32> -> vector<16x384xf32>
    %15 = vector.extract_strided_slice %14 {offsets = [0, 0], sizes = [16, 128], strides = [1, 1]} : vector<16x384xf32> to vector<16x128xf32>
    %16 = arith.truncf %15 : vector<16x128xf32> to vector<16x128xbf16>
    %17 = vector.extract_strided_slice %14 {offsets = [0, 128], sizes = [16, 128], strides = [1, 1]} : vector<16x384xf32> to vector<16x128xf32>
    %18 = arith.truncf %17 : vector<16x128xf32> to vector<16x128xbf16>
    %19 = vector.extract_strided_slice %14 {offsets = [0, 256], sizes = [16, 128], strides = [1, 1]} : vector<16x384xf32> to vector<16x128xf32>
    %20 = arith.truncf %19 : vector<16x128xf32> to vector<16x128xbf16>
    %cst_5 = arith.constant 0.000000e+00 : f32
    %21 = vector.broadcast %cst_5 : f32 to vector<16x32xf32>
    %22 = vector.extract_strided_slice %16 {offsets = [0, 0], sizes = [16, 32], strides = [1, 1]} : vector<16x128xbf16> to vector<16x32xbf16>
    %23 = vector.extract_strided_slice %18 {offsets = [0, 0], sizes = [16, 32], strides = [1, 1]} : vector<16x128xbf16> to vector<16x32xbf16>
    %cst_6 = arith.constant dense<0.000000e+00> : vector<16x16xf32>
    %24 = tpu.matmul %22, %23, %cst_6 {dimension_numbers = #tpu.dot_dimension_numbers<[1], [1], [0], [0], [0, 0, 1, 0], [], []>} : vector<16x32xbf16>, vector<16x32xbf16>, vector<16x16xf32> -> vector<16x16xf32>
    %25 = arith.addf %24, %10 : vector<16x16xf32>
    %cst_7 = arith.constant dense<0xFF800000> : vector<16xf32>
    %26 = vector.multi_reduction <maximumf>, %25, %cst_7 [1] : vector<16x16xf32> to vector<16xf32>
    %27 = vector.shape_cast %26 : vector<16xf32> to vector<16x1xf32>
    %28 = vector.broadcast %27 : vector<16x1xf32> to vector<16x16xf32>
    %29 = arith.subf %25, %28 : vector<16x16xf32>
    %30 = math.exp %29 : vector<16x16xf32>
    %cst_8 = arith.constant dense<0.000000e+00> : vector<16xf32>
    %31 = vector.multi_reduction <add>, %30, %cst_8 [1] : vector<16x16xf32> to vector<16xf32>
    %32 = vector.shape_cast %31 : vector<16xf32> to vector<16x1xf32>
    %33 = tpu.reciprocal %32 {approx = true} : vector<16x1xf32> -> vector<16x1xf32>
    %34 = vector.broadcast %33 : vector<16x1xf32> to vector<16x16xf32>
    %35 = arith.mulf %30, %34 : vector<16x16xf32>
    %36 = arith.truncf %35 : vector<16x16xf32> to vector<16x16xbf16>
    %37 = vector.extract_strided_slice %20 {offsets = [0, 0], sizes = [16, 32], strides = [1, 1]} : vector<16x128xbf16> to vector<16x32xbf16>
    %cst_9 = arith.constant dense<0.000000e+00> : vector<16x32xf32>
    %38 = tpu.matmul %36, %37, %cst_9 {dimension_numbers = #tpu.dot_dimension_numbers<[1], [0], [0], [1], [0, 0, 1, 1], [], []>} : vector<16x16xbf16>, vector<16x32xbf16>, vector<16x32xf32> -> vector<16x32xf32>
    %39 = arith.addf %21, %38 : vector<16x32xf32>
    %40 = vector.extract_strided_slice %16 {offsets = [0, 32], sizes = [16, 32], strides = [1, 1]} : vector<16x128xbf16> to vector<16x32xbf16>
    %41 = vector.extract_strided_slice %18 {offsets = [0, 32], sizes = [16, 32], strides = [1, 1]} : vector<16x128xbf16> to vector<16x32xbf16>
    %cst_10 = arith.constant dense<0.000000e+00> : vector<16x16xf32>
    %42 = tpu.matmul %40, %41, %cst_10 {dimension_numbers = #tpu.dot_dimension_numbers<[1], [1], [0], [0], [0, 0, 1, 0], [], []>} : vector<16x32xbf16>, vector<16x32xbf16>, vector<16x16xf32> -> vector<16x16xf32>
    %43 = arith.addf %42, %10 : vector<16x16xf32>
    %cst_11 = arith.constant dense<0xFF800000> : vector<16xf32>
    %44 = vector.multi_reduction <maximumf>, %43, %cst_11 [1] : vector<16x16xf32> to vector<16xf32>
    %45 = vector.shape_cast %44 : vector<16xf32> to vector<16x1xf32>
    %46 = vector.broadcast %45 : vector<16x1xf32> to vector<16x16xf32>
    %47 = arith.subf %43, %46 : vector<16x16xf32>
    %48 = math.exp %47 : vector<16x16xf32>
    %cst_12 = arith.constant dense<0.000000e+00> : vector<16xf32>
    %49 = vector.multi_reduction <add>, %48, %cst_12 [1] : vector<16x16xf32> to vector<16xf32>
    %50 = vector.shape_cast %49 : vector<16xf32> to vector<16x1xf32>
    %51 = tpu.reciprocal %50 {approx = true} : vector<16x1xf32> -> vector<16x1xf32>
    %52 = vector.broadcast %51 : vector<16x1xf32> to vector<16x16xf32>
    %53 = arith.mulf %48, %52 : vector<16x16xf32>
    %54 = arith.truncf %53 : vector<16x16xf32> to vector<16x16xbf16>
    %55 = vector.extract_strided_slice %20 {offsets = [0, 32], sizes = [16, 32], strides = [1, 1]} : vector<16x128xbf16> to vector<16x32xbf16>
    %cst_13 = arith.constant dense<0.000000e+00> : vector<16x32xf32>
    %56 = tpu.matmul %54, %55, %cst_13 {dimension_numbers = #tpu.dot_dimension_numbers<[1], [0], [0], [1], [0, 0, 1, 1], [], []>} : vector<16x16xbf16>, vector<16x32xbf16>, vector<16x32xf32> -> vector<16x32xf32>
    %57 = arith.addf %39, %56 : vector<16x32xf32>
    %58 = vector.extract_strided_slice %16 {offsets = [0, 64], sizes = [16, 32], strides = [1, 1]} : vector<16x128xbf16> to vector<16x32xbf16>
    %59 = vector.extract_strided_slice %18 {offsets = [0, 64], sizes = [16, 32], strides = [1, 1]} : vector<16x128xbf16> to vector<16x32xbf16>
    %cst_14 = arith.constant dense<0.000000e+00> : vector<16x16xf32>
    %60 = tpu.matmul %58, %59, %cst_14 {dimension_numbers = #tpu.dot_dimension_numbers<[1], [1], [0], [0], [0, 0, 1, 0], [], []>} : vector<16x32xbf16>, vector<16x32xbf16>, vector<16x16xf32> -> vector<16x16xf32>
    %61 = arith.addf %60, %10 : vector<16x16xf32>
    %cst_15 = arith.constant dense<0xFF800000> : vector<16xf32>
    %62 = vector.multi_reduction <maximumf>, %61, %cst_15 [1] : vector<16x16xf32> to vector<16xf32>
    %63 = vector.shape_cast %62 : vector<16xf32> to vector<16x1xf32>
    %64 = vector.broadcast %63 : vector<16x1xf32> to vector<16x16xf32>
    %65 = arith.subf %61, %64 : vector<16x16xf32>
    %66 = math.exp %65 : vector<16x16xf32>
    %cst_16 = arith.constant dense<0.000000e+00> : vector<16xf32>
    %67 = vector.multi_reduction <add>, %66, %cst_16 [1] : vector<16x16xf32> to vector<16xf32>
    %68 = vector.shape_cast %67 : vector<16xf32> to vector<16x1xf32>
    %69 = tpu.reciprocal %68 {approx = true} : vector<16x1xf32> -> vector<16x1xf32>
    %70 = vector.broadcast %69 : vector<16x1xf32> to vector<16x16xf32>
    %71 = arith.mulf %66, %70 : vector<16x16xf32>
    %72 = arith.truncf %71 : vector<16x16xf32> to vector<16x16xbf16>
    %73 = vector.extract_strided_slice %20 {offsets = [0, 64], sizes = [16, 32], strides = [1, 1]} : vector<16x128xbf16> to vector<16x32xbf16>
    %cst_17 = arith.constant dense<0.000000e+00> : vector<16x32xf32>
    %74 = tpu.matmul %72, %73, %cst_17 {dimension_numbers = #tpu.dot_dimension_numbers<[1], [0], [0], [1], [0, 0, 1, 1], [], []>} : vector<16x16xbf16>, vector<16x32xbf16>, vector<16x32xf32> -> vector<16x32xf32>
    %75 = arith.addf %57, %74 : vector<16x32xf32>
    %76 = vector.extract_strided_slice %16 {offsets = [0, 96], sizes = [16, 32], strides = [1, 1]} : vector<16x128xbf16> to vector<16x32xbf16>
    %77 = vector.extract_strided_slice %18 {offsets = [0, 96], sizes = [16, 32], strides = [1, 1]} : vector<16x128xbf16> to vector<16x32xbf16>
    %cst_18 = arith.constant dense<0.000000e+00> : vector<16x16xf32>
    %78 = tpu.matmul %76, %77, %cst_18 {dimension_numbers = #tpu.dot_dimension_numbers<[1], [1], [0], [0], [0, 0, 1, 0], [], []>} : vector<16x32xbf16>, vector<16x32xbf16>, vector<16x16xf32> -> vector<16x16xf32>
    %79 = arith.addf %78, %10 : vector<16x16xf32>
    %cst_19 = arith.constant dense<0xFF800000> : vector<16xf32>
    %80 = vector.multi_reduction <maximumf>, %79, %cst_19 [1] : vector<16x16xf32> to vector<16xf32>
    %81 = vector.shape_cast %80 : vector<16xf32> to vector<16x1xf32>
    %82 = vector.broadcast %81 : vector<16x1xf32> to vector<16x16xf32>
    %83 = arith.subf %79, %82 : vector<16x16xf32>
    %84 = math.exp %83 : vector<16x16xf32>
    %cst_20 = arith.constant dense<0.000000e+00> : vector<16xf32>
    %85 = vector.multi_reduction <add>, %84, %cst_20 [1] : vector<16x16xf32> to vector<16xf32>
    %86 = vector.shape_cast %85 : vector<16xf32> to vector<16x1xf32>
    %87 = tpu.reciprocal %86 {approx = true} : vector<16x1xf32> -> vector<16x1xf32>
    %88 = vector.broadcast %87 : vector<16x1xf32> to vector<16x16xf32>
    %89 = arith.mulf %84, %88 : vector<16x16xf32>
    %90 = arith.truncf %89 : vector<16x16xf32> to vector<16x16xbf16>
    %91 = vector.extract_strided_slice %20 {offsets = [0, 96], sizes = [16, 32], strides = [1, 1]} : vector<16x128xbf16> to vector<16x32xbf16>
    %cst_21 = arith.constant dense<0.000000e+00> : vector<16x32xf32>
    %92 = tpu.matmul %90, %91, %cst_21 {dimension_numbers = #tpu.dot_dimension_numbers<[1], [0], [0], [1], [0, 0, 1, 1], [], []>} : vector<16x16xbf16>, vector<16x32xbf16>, vector<16x32xf32> -> vector<16x32xf32>
    %93 = arith.addf %75, %92 : vector<16x32xf32>
    %94 = vector.broadcast %3 : vector<1x32xf32> to vector<16x32xf32>
    %95 = arith.addf %93, %94 : vector<16x32xf32>
    %96 = arith.addf %95, %0 : vector<16x32xf32>
    %cst_22 = arith.constant dense<0.000000e+00> : vector<16xf32>
    %97 = vector.multi_reduction <add>, %96, %cst_22 [1] : vector<16x32xf32> to vector<16xf32>
    %98 = vector.shape_cast %97 : vector<16xf32> to vector<16x1xf32>
    %cst_23 = arith.constant 3.200000e+01 : f32
    %99 = vector.broadcast %cst_23 : f32 to vector<16x1xf32>
    %100 = arith.divf %98, %99 : vector<16x1xf32>
    %101 = vector.broadcast %100 : vector<16x1xf32> to vector<16x32xf32>
    %102 = arith.subf %96, %101 : vector<16x32xf32>
    %103 = arith.mulf %102, %102 : vector<16x32xf32>
    %cst_24 = arith.constant dense<0.000000e+00> : vector<16xf32>
    %104 = vector.multi_reduction <add>, %103, %cst_24 [1] : vector<16x32xf32> to vector<16xf32>
    %105 = vector.shape_cast %104 : vector<16xf32> to vector<16x1xf32>
    %cst_25 = arith.constant 3.200000e+01 : f32
    %106 = vector.broadcast %cst_25 : f32 to vector<16x1xf32>
    %107 = arith.divf %105, %106 : vector<16x1xf32>
    %108 = vector.broadcast %100 : vector<16x1xf32> to vector<16x32xf32>
    %109 = arith.subf %96, %108 : vector<16x32xf32>
    %cst_26 = arith.constant 9.99999974E-6 : f32
    %110 = vector.broadcast %cst_26 : f32 to vector<16x1xf32>
    %111 = arith.addf %107, %110 : vector<16x1xf32>
    %112 = math.rsqrt %111 : vector<16x1xf32>
    %113 = vector.broadcast %112 : vector<16x1xf32> to vector<16x32xf32>
    %114 = arith.mulf %109, %113 : vector<16x32xf32>
    %115 = vector.broadcast %4 : vector<1x32xf32> to vector<16x32xf32>
    %116 = arith.mulf %114, %115 : vector<16x32xf32>
    %117 = vector.broadcast %5 : vector<1x32xf32> to vector<16x32xf32>
    %118 = arith.addf %116, %117 : vector<16x32xf32>
    %119 = arith.truncf %114 : vector<16x32xf32> to vector<16x32xbf16>
    %cst_27 = arith.constant dense<0.000000e+00> : vector<16x128xf32>
    %120 = tpu.matmul %119, %13, %cst_27 {dimension_numbers = #tpu.dot_dimension_numbers<[1], [0], [0], [1], [0, 0, 1, 1], [], []>} : vector<16x32xbf16>, vector<32x128xbf16>, vector<16x128xf32> -> vector<16x128xf32>
    %121 = vector.broadcast %6 : vector<1x128xf32> to vector<16x128xf32>
    %122 = arith.addf %120, %121 : vector<16x128xf32>
    %cst_28 = arith.constant 0.000000e+00 : f32
    %123 = vector.broadcast %cst_28 : f32 to vector<16x128xf32>
    %124 = arith.maximumf %122, %123 : vector<16x128xf32>
    %125 = arith.truncf %124 : vector<16x128xf32> to vector<16x128xbf16>
    %c0_29 = arith.constant 0 : index
    %c0_30 = arith.constant 0 : index
    %126 = vector.load %arg3[%c0_29, %c0_30] : memref<128x32xbf16, #tpu.memory_space<vmem>>, vector<128x32xbf16>
    %cst_31 = arith.constant dense<0.000000e+00> : vector<16x32xf32>
    %127 = tpu.matmul %125, %126, %cst_31 {dimension_numbers = #tpu.dot_dimension_numbers<[1], [0], [0], [1], [0, 0, 1, 1], [], []>} : vector<16x128xbf16>, vector<128x32xbf16>, vector<16x32xf32> -> vector<16x32xf32>
    %128 = vector.broadcast %7 : vector<1x32xf32> to vector<16x32xf32>
    %129 = arith.addf %127, %128 : vector<16x32xf32>
    %130 = arith.addf %129, %118 : vector<16x32xf32>
    %cst_32 = arith.constant dense<0.000000e+00> : vector<16xf32>
    %131 = vector.multi_reduction <add>, %130, %cst_32 [1] : vector<16x32xf32> to vector<16xf32>
    %132 = vector.shape_cast %131 : vector<16xf32> to vector<16x1xf32>
    %cst_33 = arith.constant 3.200000e+01 : f32
    %133 = vector.broadcast %cst_33 : f32 to vector<16x1xf32>
    %134 = arith.divf %132, %133 : vector<16x1xf32>
    %135 = vector.broadcast %134 : vector<16x1xf32> to vector<16x32xf32>
    %136 = arith.subf %130, %135 : vector<16x32xf32>
    %137 = arith.mulf %136, %136 : vector<16x32xf32>
    %cst_34 = arith.constant dense<0.000000e+00> : vector<16xf32>
    %138 = vector.multi_reduction <add>, %137, %cst_34 [1] : vector<16x32xf32> to vector<16xf32>
    %139 = vector.shape_cast %138 : vector<16xf32> to vector<16x1xf32>
    %cst_35 = arith.constant 3.200000e+01 : f32
    %140 = vector.broadcast %cst_35 : f32 to vector<16x1xf32>
    %141 = arith.divf %139, %140 : vector<16x1xf32>
    %142 = vector.broadcast %134 : vector<16x1xf32> to vector<16x32xf32>
    %143 = arith.subf %130, %142 : vector<16x32xf32>
    %cst_36 = arith.constant 9.99999974E-6 : f32
    %144 = vector.broadcast %cst_36 : f32 to vector<16x1xf32>
    %145 = arith.addf %141, %144 : vector<16x1xf32>
    %146 = math.rsqrt %145 : vector<16x1xf32>
    %147 = vector.broadcast %146 : vector<16x1xf32> to vector<16x32xf32>
    %148 = arith.mulf %143, %147 : vector<16x32xf32>
    %149 = vector.broadcast %8 : vector<1x32xf32> to vector<16x32xf32>
    %150 = arith.mulf %148, %149 : vector<16x32xf32>
    %151 = vector.broadcast %9 : vector<1x32xf32> to vector<16x32xf32>
    %152 = arith.addf %150, %151 : vector<16x32xf32>
    %c0_37 = arith.constant 0 : index
    %c0_38 = arith.constant 0 : index
    %153 = vector.load %arg5[%c0_37, %c0_38] : memref<16x32xf32, #tpu.memory_space<vmem>>, vector<16x32xf32>
    tpu.vector_store %arg5[%c0_37, %c0_38], %152 {strides = array<i32>} : memref<16x32xf32, #tpu.memory_space<vmem>>, vector<16x32xf32>,
    return
  }
  func.func @transform_0(%arg0: i32) -> (i32, i32) {
    %c0_i32 = arith.constant 0 : i32
    %c0_i32_0 = arith.constant 0 : i32
    %c0_i32_1 = arith.constant 0 : i32
    return %c0_i32, %c0_i32_0 : i32, i32
  }
  func.func @transform_1(%arg0: i32) -> (i32, i32) {
    %c0_i32 = arith.constant 0 : i32
    %c0_i32_0 = arith.constant 0 : i32
    %c0_i32_1 = arith.constant 0 : i32
    return %c0_i32, %c0_i32_0 : i32, i32
  }
  func.func @transform_2(%arg0: i32) -> (i32, i32) {
    %c0_i32 = arith.constant 0 : i32
    %c0_i32_0 = arith.constant 0 : i32
    %c0_i32_1 = arith.constant 0 : i32
    return %c0_i32, %c0_i32_0 : i32, i32
  }
  func.func @transform_3(%arg0: i32) -> (i32, i32) {
    %c0_i32 = arith.constant 0 : i32
    %c0_i32_0 = arith.constant 0 : i32
    %c0_i32_1 = arith.constant 0 : i32
    return %c0_i32, %c0_i32_0 : i32, i32
  }
  func.func @transform_4(%arg0: i32) -> (i32, i32) {
    %c0_i32 = arith.constant 0 : i32
    %c0_i32_0 = arith.constant 0 : i32
    %c0_i32_1 = arith.constant 0 : i32
    return %c0_i32, %c0_i32_0 : i32, i32
  }
}

</mosaic_0001>

<llo_original>
// kernel: tpu_custom_call.1
$region0: #{tpu_custom_call.1}
  #allocation0 [shape = 'u32[]', space=smem, size = 0x4, offset = 0x4, fixed_abs, tag = 'smem constant byte address 0x4 - core index']
  #allocation1 [shape = 'u32[144,128]{1,0:T(1,128)}', space=vmem, size = 0x12000, scoped, tag = 'internal scratch']
  %s0 = inlined_call_operand.vmem [shape: f32[16,32], index: 0, kind: input, shape index: {}]
  %s1 = inlined_call_operand.vmem [shape: bf16[32,512], index: 1, kind: input, shape index: {}]
  %s2 = inlined_call_operand.vmem [shape: bf16[128,32], index: 2, kind: input, shape index: {}]
  %s3 = inlined_call_operand.hbm [shape: f32[24,128], index: 3, kind: input, shape index: {}]
  %s4 = inlined_call_operand.hbm [shape: f32[16,32], index: 4, kind: output, shape index: {}]
  %s5 = sld [smem:[#allocation0]]
  $region30: #{tpu_custom_call.1} parent=0
    _
  %s7 = ssub.s32 1, %s5
  %s8 = scalar_select 0, %s7, %s5
  $region1: #{tpu_custom_call.1} parent=0
    #allocation2 [shape = 'u8[12288]{0}', space=vmem, size = 0x3000, scoped, tag = 'input window, operand 3, single buffered']
    #allocation3 [shape = 's32[1]{0}', space=sflag, size = 0x4, scoped, tag = 'scoped memory for tpu_custom_call.1']
    #allocation4 [shape = 's32[1]{0}', space=sflag, size = 0x4, scoped, tag = 'scoped memory for tpu_custom_call.1']
    #allocation5 [shape = 'u8[8192]{0}', space=vmem, size = 0x2000, scoped, tag = 'output window, operand 0, single buffered']
    %9 = vsyncpa [#allocation3], 0
    %10 = vsyncpa [#allocation4], 0
    // Predicated region
    $region2: #{tpu_custom_call.1} parent=1 // pred_check
      _
    $region3: #{tpu_custom_call.1} parent=1 // pred_check_branch
      %12 = sbr.rel (0) target = $region5
    $region4: #{tpu_custom_call.1} parent=1 // pred_region
      _
    $region5: #{tpu_custom_call.1} parent=1 // pred_fallthru
      _
    // Predicated region
    $region6: #{tpu_custom_call.1} parent=1 // pred_check
      _
    $region7: #{tpu_custom_call.1} parent=1 // pred_check_branch
      %14 = sbr.rel (0) target = $region9
    $region8: #{tpu_custom_call.1} parent=1 // pred_region
      _
    $region9: #{tpu_custom_call.1} parent=1 // pred_fallthru
      _
    // Predicated region
    $region10: #{tpu_custom_call.1} parent=1 // pred_check
      _
    $region11: #{tpu_custom_call.1} parent=1 // pred_check_branch
      %16 = sbr.rel (0) target = $region13
    $region12: #{tpu_custom_call.1} parent=1 // pred_region
      _
    $region13: #{tpu_custom_call.1} parent=1 // pred_fallthru
      _
    // Predicated region
    $region14: #{tpu_custom_call.1} parent=1 // pred_check
      _
    $region15: #{tpu_custom_call.1} parent=1 // pred_check_branch
      %18 = sbr.rel (0) target = $region17
    $region16: #{tpu_custom_call.1} parent=1 // pred_region
      %s20 = ssub.s32 384, 384
      %21 = vsyncadd [#allocation3], %s20
      %s22 = sshll.u32 [#allocation2], 4
      %s23 = int_to_ptr.vmem [resolvable:$true] %s22
      %28 = dma.hbm_to_vmem [thread:$0]  %s3, 384, %s23, [#allocation3], 128, 128, 8
    $region17: #{tpu_custom_call.1} parent=1 // pred_fallthru
      _
    // Predicated region
    $region18: #{tpu_custom_call.1} parent=1 // pred_check
      _
    $region19: #{tpu_custom_call.1} parent=1 // pred_check_branch
      %30 = sbr.rel (0) target = $region21
    $region20: #{tpu_custom_call.1} parent=1 // pred_region
      %31 = dma.done [#allocation3], 384
    $region21: #{tpu_custom_call.1} parent=1 // pred_fallthru
      _
    %v33 = vld [vmem:[%s0] sm:$0xff]
    %v34 = vld [vmem:[%s0 + $0x8] sm:$0xff]
    %v35 = vpack.c.bf16 %v34, %v33
    %v36 = vld [vmem:[#allocation2] sm:$0xff]
    %v37 = vld [vmem:[#allocation2 + $0x8] sm:$0xff]
    %v38 = vld [vmem:[#allocation2 + $0x10] sm:$0xff]
    %v39 = vld [vmem:[%s1] sm:$0xff]
    %v40 = vld [vmem:[%s1 + $0x8] sm:$0xff]
    %v41 = vld [vmem:[%s1 + $0x10] sm:$0xff]
    %v42 = vld [vmem:[%s1 + $0x18] sm:$0xff]
    %v43 = vld [vmem:[%s1 + $0x20] sm:$0xff]
    %v44 = vld [vmem:[%s1 + $0x28] sm:$0xff]
    %v45 = vld [vmem:[%s1 + $0x30] sm:$0xff]
    %v46 = vld [vmem:[%s1 + $0x38] sm:$0xff]
    %v55 = vunpack.c.l.b16 %v39
    %v56 = vunpack.c.h.b16 %v39
    %v57 = vunpack.c.l.b16 %v40
    %v58 = vunpack.c.l.b16 %v41
    %v59 = vunpack.c.h.b16 %v41
    %v60 = vunpack.c.l.b16 %v42
    %v61 = vunpack.c.l.b16 %v43
    %v62 = vunpack.c.h.b16 %v43
    %v63 = vunpack.c.l.b16 %v44
    %v64 = vunpack.c.l.b16 %v45
    %v65 = vunpack.c.h.b16 %v45
    %v66 = vunpack.c.l.b16 %v46
    %v67 = vpack.c.b16 %v58, %v55
    %v68 = vpack.c.b16 %v59, %v56
    %v69 = vpack.c.b16 %v60, %v57
    %v70 = vpack.c.b16 %v64, %v61
    %v71 = vpack.c.b16 %v65, %v62
    %v72 = vpack.c.b16 %v66, %v63
    %vm79 = vcmask 261120
    %v81 = vsel %vm79, %v35, 0
    %83 = vmatprep.subr.bf16.mxu0 0
    %84 = vmatpush1.bf16.msra.mxu0 0
    %85 = vmatprep.subr.bf16.mxu0 0
    %86 = vmatpush1.bf16.msra.mxu0 0
    %87 = vmatprep.subr.bf16.mxu0 0
    %88 = vmatpush1.bf16.msra.mxu0 0
    %89 = vmatprep.subr.bf16.mxu0 0
    %90 = vmatpush1.bf16.msra.mxu0 0
    %91 = vmatprep.subr.bf16.mxu0 0
    %92 = vmatpush1.bf16.msra.mxu0 0
    %93 = vmatprep.subr.bf16.mxu0 0
    %94 = vmatpush1.bf16.msra.mxu0 0
    %95 = vmatprep.subr.bf16.mxu0 %v71
    %96 = vmatpush1.bf16.msra.mxu0 %v70
    %97 = vmatprep.subr.bf16.mxu0 %v68
    %98 = vmatpush1.bf16.msra.mxu0 %v67
    %99 = vmatprep.subr.bf16.mxu0 0
    %100 = vmatpush2.bf16.msra.mxu0 0
    %101 = vmatprep.subr.bf16.mxu0 0
    %102 = vmatpush2.bf16.msra.mxu0 0
    %103 = vmatprep.subr.bf16.mxu0 0
    %104 = vmatpush2.bf16.msra.mxu0 0
    %105 = vmatprep.subr.bf16.mxu0 0
    %106 = vmatpush2.bf16.msra.mxu0 0
    %107 = vmatprep.subr.bf16.mxu0 0
    %108 = vmatpush2.bf16.msra.mxu0 0
    %109 = vmatprep.subr.bf16.mxu0 0
    %110 = vmatpush2.bf16.msra.mxu0 0
    %111 = vmatprep.subr.bf16.mxu0 0
    %112 = vmatpush2.bf16.msra.mxu0 0
    %113 = vmatprep.subr.bf16.mxu0 0
    %114 = vmatpush2.bf16.msra.mxu0 0
    %115 = vmatprep.mubr.bf16.mxu0 0
    %116 = vmatmul.mubr.bf16.gmra.mxu0 %v81
    %v117 = vpop.f32.mrf.mxu0
    %v118 = vadd.f32 0.0, %v117
    %v119 = vpop.f32.mrf.mxu0
    %v120 = vadd.f32 0.0, %v119
    %v121 = vpop.f32.mrf.mxu0
    %v122 = vadd.f32 0.0, %v121
    %v123 = vpop.f32.mrf.mxu0
    %v124 = vadd.f32 0.0, %v123
    %125 = vdwg.mxu0
    %126 = vmatprep.subr.bf16.mxu0 0
    %127 = vmatpush1.bf16.msra.mxu0 0
    %128 = vmatprep.subr.bf16.mxu0 0
    %129 = vmatpush1.bf16.msra.mxu0 0
    %130 = vmatprep.subr.bf16.mxu0 0
    %131 = vmatpush1.bf16.msra.mxu0 0
    %132 = vmatprep.subr.bf16.mxu0 0
    %133 = vmatpush1.bf16.msra.mxu0 0
    %134 = vmatprep.subr.bf16.mxu0 0
    %135 = vmatpush1.bf16.msra.mxu0 0
    %136 = vmatprep.subr.bf16.mxu0 0
    %137 = vmatpush1.bf16.msra.mxu0 0
    %138 = vmatprep.subr.bf16.mxu0 0
    %139 = vmatpush1.bf16.msra.mxu0 %v72
    %140 = vmatprep.subr.bf16.mxu0 0
    %141 = vmatpush1.bf16.msra.mxu0 %v69
    %142 = vmatprep.subr.bf16.mxu0 0
    %143 = vmatpush2.bf16.msra.mxu0 0
    %144 = vmatprep.subr.bf16.mxu0 0
    %145 = vmatpush2.bf16.msra.mxu0 0
    %146 = vmatprep.subr.bf16.mxu0 0
    %147 = vmatpush2.bf16.msra.mxu0 0
    %148 = vmatprep.subr.bf16.mxu0 0
    %149 = vmatpush2.bf16.msra.mxu0 0
    %150 = vmatprep.subr.bf16.mxu0 0
    %151 = vmatpush2.bf16.msra.mxu0 0
    %152 = vmatprep.subr.bf16.mxu0 0
    %153 = vmatpush2.bf16.msra.mxu0 0
    %154 = vmatprep.subr.bf16.mxu0 0
    %155 = vmatpush2.bf16.msra.mxu0 0
    %156 = vmatprep.subr.bf16.mxu0 0
    %157 = vmatpush2.bf16.msra.mxu0 0
    %158 = vmatprep.mubr.bf16.mxu0 0
    %159 = vmatmul.mubr.bf16.gmra.mxu0 %v81
    %v160 = vpop.f32.mrf.mxu0
    %v161 = vadd.f32 0.0, %v160
    %v162 = vpop.f32.mrf.mxu0
    %v163 = vpop.f32.mrf.mxu0
    %v164 = vadd.f32 0.0, %v163
    %v165 = vpop.f32.mrf.mxu0
    %166 = vdwg.mxu0
    %v167 = vpack.c.bf16 %v122, %v118
    %v168 = vpack.c.bf16 %v124, %v120
    %v169 = vpack.c.bf16 %v164, %v161
    %v171 = vsel %vm79, %v167, 0
    %v174 = vsel %vm79, %v168, 0
    %176 = vmatprep.subr.bf16.mxu0 0
    %177 = vmatpush1.bf16.xpose.msra.mxu0 0
    %178 = vmatprep.subr.bf16.mxu0 0
    %179 = vmatpush1.bf16.xpose.msra.mxu0 0
    %180 = vmatprep.subr.bf16.mxu0 0
    %181 = vmatpush1.bf16.xpose.msra.mxu0 0
    %182 = vmatprep.subr.bf16.mxu0 0
    %183 = vmatpush1.bf16.xpose.msra.mxu0 0
    %184 = vmatprep.subr.bf16.mxu0 0
    %185 = vmatpush1.bf16.xpose.msra.mxu0 0
    %186 = vmatprep.subr.bf16.mxu0 0
    %187 = vmatpush1.bf16.xpose.msra.mxu0 0
    %188 = vmatprep.subr.bf16.mxu0 0
    %189 = vmatpush1.bf16.xpose.msra.mxu0 0
    %190 = vmatprep.subr.bf16.mxu0 0
    %191 = vmatpush1.bf16.xpose.msra.mxu0 %v174
    %192 = vmatprep.subr.bf16.mxu0 0
    %193 = vmatpush2.bf16.xpose.msra.mxu0 0
    %194 = vmatprep.subr.bf16.mxu0 0
    %195 = vmatpush2.bf16.xpose.msra.mxu0 0
    %196 = vmatprep.subr.bf16.mxu0 0
    %197 = vmatpush2.bf16.xpose.msra.mxu0 0
    %198 = vmatprep.subr.bf16.mxu0 0
    %199 = vmatpush2.bf16.xpose.msra.mxu0 0
    %200 = vmatprep.subr.bf16.mxu0 0
    %201 = vmatpush2.bf16.xpose.msra.mxu0 0
    %202 = vmatprep.subr.bf16.mxu0 0
    %203 = vmatpush2.bf16.xpose.msra.mxu0 0
    %204 = vmatprep.subr.bf16.mxu0 0
    %205 = vmatpush2.bf16.xpose.msra.mxu0 0
    %206 = vmatprep.subr.bf16.mxu0 0
    %207 = vmatpush2.bf16.xpose.msra.mxu0 0
    %208 = vmatprep.mubr.bf16.mxu0 0
    %209 = vmatmul.mubr.bf16.gmra.mxu0 %v171
    %v210 = vpop.f32.mrf.mxu0
    %v211 = vadd.f32 %v37, %v210
    %v212 = vpop.f32.mrf.mxu0
    %v213 = vpop.f32.mrf.mxu0
    %v214 = vadd.f32 %v38, %v213
    %v215 = vpop.f32.mrf.mxu0
    %216 = vdwg.mxu0
    %vm217 = vcmask 130048
    %v218 = vsel %vm217, %v211, -inf
    %219 = vmax.xlane.f32.xlu0 %v218
    %v220 = vpop.xlane.xlu0 %219
    %v221 = vsel %vm217, %v214, -inf
    %222 = vmax.xlane.f32.xlu0 %v221
    %v223 = vpop.xlane.xlu0 %222
    %v224 = vsub.f32 %v211, %v220
    %v225 = vsub.f32 %v214, %v223
    %v226 = vmul.f32 %v224, 1.442695
    %v227 = vpow.pop %v226
    %v228 = vmul.f32 %v225, 1.442695
    %v229 = vpow.pop %v228
    %v230 = vsel %vm217, %v227, 0.0
    %231 = vadd.xlane.f32.xlu0 %v230
    %v232 = vpop.xlane.xlu0 %231
    %v233 = vsel %vm217, %v229, 0.0
    %234 = vadd.xlane.f32.xlu0 %v233
    %v235 = vpop.xlane.xlu0 %234
    %v236 = vrcp.pop %v232
    %v237 = vrcp.pop %v235
    %v238 = vmul.f32 %v227, %v236
    %v239 = vmul.f32 %v229, %v237
    %v240 = vpack.c.bf16 %v239, %v238
    %242 = vrot.lane.b32.xlu0 %v167, 96
    %v243 = vpop.permute.xlu0 %242
    %245 = vrot.lane.b32.xlu0 %v168, 96
    %v246 = vpop.permute.xlu0 %245
    %v248 = vsel %vm79, %v243, 0
    %v251 = vsel %vm79, %v246, 0
    %253 = vmatprep.subr.bf16.mxu0 0
    %254 = vmatpush1.bf16.xpose.msra.mxu0 0
    %255 = vmatprep.subr.bf16.mxu0 0
    %256 = vmatpush1.bf16.xpose.msra.mxu0 0
    %257 = vmatprep.subr.bf16.mxu0 0
    %258 = vmatpush1.bf16.xpose.msra.mxu0 0
    %259 = vmatprep.subr.bf16.mxu0 0
    %260 = vmatpush1.bf16.xpose.msra.mxu0 0
    %261 = vmatprep.subr.bf16.mxu0 0
    %262 = vmatpush1.bf16.xpose.msra.mxu0 0
    %263 = vmatprep.subr.bf16.mxu0 0
    %264 = vmatpush1.bf16.xpose.msra.mxu0 0
    %265 = vmatprep.subr.bf16.mxu0 0
    %266 = vmatpush1.bf16.xpose.msra.mxu0 0
    %267 = vmatprep.subr.bf16.mxu0 0
    %268 = vmatpush1.bf16.xpose.msra.mxu0 %v251
    %269 = vmatprep.subr.bf16.mxu0 0
    %270 = vmatpush2.bf16.xpose.msra.mxu0 0
    %271 = vmatprep.subr.bf16.mxu0 0
    %272 = vmatpush2.bf16.xpose.msra.mxu0 0
    %273 = vmatprep.subr.bf16.mxu0 0
    %274 = vmatpush2.bf16.xpose.msra.mxu0 0
    %275 = vmatprep.subr.bf16.mxu0 0
    %276 = vmatpush2.bf16.xpose.msra.mxu0 0
    %277 = vmatprep.subr.bf16.mxu0 0
    %278 = vmatpush2.bf16.xpose.msra.mxu0 0
    %279 = vmatprep.subr.bf16.mxu0 0
    %280 = vmatpush2.bf16.xpose.msra.mxu0 0
    %281 = vmatprep.subr.bf16.mxu0 0
    %282 = vmatpush2.bf16.xpose.msra.mxu0 0
    %283 = vmatprep.subr.bf16.mxu0 0
    %284 = vmatpush2.bf16.xpose.msra.mxu0 0
    %285 = vmatprep.mubr.bf16.mxu0 0
    %286 = vmatmul.mubr.bf16.gmra.mxu0 %v248
    %v287 = vpop.f32.mrf.mxu0
    %v288 = vadd.f32 %v37, %v287
    %v289 = vpop.f32.mrf.mxu0
    %v290 = vpop.f32.mrf.mxu0
    %v291 = vadd.f32 %v38, %v290
    %v292 = vpop.f32.mrf.mxu0
    %293 = vdwg.mxu0
    %v294 = vsel %vm217, %v288, -inf
    %295 = vmax.xlane.f32.xlu0 %v294
    %v296 = vpop.xlane.xlu0 %295
    %v297 = vsel %vm217, %v291, -inf
    %298 = vmax.xlane.f32.xlu0 %v297
    %v299 = vpop.xlane.xlu0 %298
    %v300 = vsub.f32 %v288, %v296
    %v301 = vsub.f32 %v291, %v299
    %v302 = vmul.f32 %v300, 1.442695
    %v303 = vpow.pop %v302
    %v304 = vmul.f32 %v301, 1.442695
    %v305 = vpow.pop %v304
    %v306 = vsel %vm217, %v303, 0.0
    %307 = vadd.xlane.f32.xlu0 %v306
    %v308 = vpop.xlane.xlu0 %307
    %v309 = vsel %vm217, %v305, 0.0
    %310 = vadd.xlane.f32.xlu0 %v309
    %v311 = vpop.xlane.xlu0 %310
    %v312 = vrcp.pop %v308
    %v313 = vrcp.pop %v311
    %v314 = vmul.f32 %v303, %v312
    %v315 = vmul.f32 %v305, %v313
    %v316 = vpack.c.bf16 %v315, %v314
    %318 = vrot.lane.b32.xlu0 %v169, 96
    %v319 = vpop.permute.xlu0 %318
    %v322 = vsel %vm217, %v316, 0
    %324 = vmatprep.subr.bf16.mxu0 0
    %325 = vmatpush1.bf16.msra.mxu0 0
    %326 = vmatprep.subr.bf16.mxu0 0
    %327 = vmatpush1.bf16.msra.mxu0 0
    %328 = vmatprep.subr.bf16.mxu0 0
    %329 = vmatpush1.bf16.msra.mxu0 0
    %330 = vmatprep.subr.bf16.mxu0 0
    %331 = vmatpush1.bf16.msra.mxu0 0
    %332 = vmatprep.subr.bf16.mxu0 0
    %333 = vmatpush1.bf16.msra.mxu0 0
    %334 = vmatprep.subr.bf16.mxu0 0
    %335 = vmatpush1.bf16.msra.mxu0 0
    %336 = vmatprep.subr.bf16.mxu0 0
    %337 = vmatpush1.bf16.msra.mxu0 0
    %338 = vmatprep.subr.bf16.mxu0 0
    %339 = vmatpush1.bf16.msra.mxu0 %v319
    %340 = vmatprep.subr.bf16.mxu0 0
    %341 = vmatpush2.bf16.msra.mxu0 0
    %342 = vmatprep.subr.bf16.mxu0 0
    %343 = vmatpush2.bf16.msra.mxu0 0
    %344 = vmatprep.subr.bf16.mxu0 0
    %345 = vmatpush2.bf16.msra.mxu0 0
    %346 = vmatprep.subr.bf16.mxu0 0
    %347 = vmatpush2.bf16.msra.mxu0 0
    %348 = vmatprep.subr.bf16.mxu0 0
    %349 = vmatpush2.bf16.msra.mxu0 0
    %350 = vmatprep.subr.bf16.mxu0 0
    %351 = vmatpush2.bf16.msra.mxu0 0
    %352 = vmatprep.subr.bf16.mxu0 0
    %353 = vmatpush2.bf16.msra.mxu0 0
    %354 = vmatprep.subr.bf16.mxu0 0
    %355 = vmatpush2.bf16.msra.mxu0 0
    %356 = vmatprep.mubr.bf16.mxu0 0
    %357 = vmatmul.mubr.bf16.gmra.mxu0 %v322
    %v358 = vpop.f32.mrf.mxu0
    %v359 = vadd.f32 0.0, %v358
    %v360 = vpop.f32.mrf.mxu0
    %v361 = vpop.f32.mrf.mxu0
    %v362 = vadd.f32 0.0, %v361
    %v363 = vpop.f32.mrf.mxu0
    %364 = vdwg.mxu0
    %v366 = vsel %vm217, %v240, 0
    %368 = vmatprep.subr.bf16.mxu0 0
    %369 = vmatpush1.bf16.msra.mxu0 0
    %370 = vmatprep.subr.bf16.mxu0 0
    %371 = vmatpush1.bf16.msra.mxu0 0
    %372 = vmatprep.subr.bf16.mxu0 0
    %373 = vmatpush1.bf16.msra.mxu0 0
    %374 = vmatprep.subr.bf16.mxu0 0
    %375 = vmatpush1.bf16.msra.mxu0 0
    %376 = vmatprep.subr.bf16.mxu0 0
    %377 = vmatpush1.bf16.msra.mxu0 0
    %378 = vmatprep.subr.bf16.mxu0 0
    %379 = vmatpush1.bf16.msra.mxu0 0
    %380 = vmatprep.subr.bf16.mxu0 0
    %381 = vmatpush1.bf16.msra.mxu0 0
    %382 = vmatprep.subr.bf16.mxu0 0
    %383 = vmatpush1.bf16.msra.mxu0 %v169
    %384 = vmatprep.subr.bf16.mxu0 0
    %385 = vmatpush2.bf16.msra.mxu0 0
    %386 = vmatprep.subr.bf16.mxu0 0
    %387 = vmatpush2.bf16.msra.mxu0 0
    %388 = vmatprep.subr.bf16.mxu0 0
    %389 = vmatpush2.bf16.msra.mxu0 0
    %390 = vmatprep.subr.bf16.mxu0 0
    %391 = vmatpush2.bf16.msra.mxu0 0
    %392 = vmatprep.subr.bf16.mxu0 0
    %393 = vmatpush2.bf16.msra.mxu0 0
    %394 = vmatprep.subr.bf16.mxu0 0
    %395 = vmatpush2.bf16.msra.mxu0 0
    %396 = vmatprep.subr.bf16.mxu0 0
    %397 = vmatpush2.bf16.msra.mxu0 0
    %398 = vmatprep.subr.bf16.mxu0 0
    %399 = vmatpush2.bf16.msra.mxu0 0
    %400 = vmatprep.mubr.bf16.mxu0 0
    %401 = vmatmul.mubr.bf16.gmra.mxu0 %v366
    %v402 = vpop.f32.mrf.mxu0
    %v403 = vadd.f32 %v359, %v402
    %v404 = vpop.f32.mrf.mxu0
    %v405 = vpop.f32.mrf.mxu0
    %v406 = vadd.f32 %v362, %v405
    %v407 = vpop.f32.mrf.mxu0
    %408 = vdwg.mxu0
    %409 = vrot.lane.b32.xlu0 %v167, 64
    %v410 = vpop.permute.xlu0 %409
    %411 = vrot.lane.b32.xlu0 %v168, 64
    %v412 = vpop.permute.xlu0 %411
    %v414 = vsel %vm79, %v410, 0
    %v417 = vsel %vm79, %v412, 0
    %419 = vmatprep.subr.bf16.mxu0 0
    %420 = vmatpush1.bf16.xpose.msra.mxu0 0
    %421 = vmatprep.subr.bf16.mxu0 0
    %422 = vmatpush1.bf16.xpose.msra.mxu0 0
    %423 = vmatprep.subr.bf16.mxu0 0
    %424 = vmatpush1.bf16.xpose.msra.mxu0 0
    %425 = vmatprep.subr.bf16.mxu0 0
    %426 = vmatpush1.bf16.xpose.msra.mxu0 0
    %427 = vmatprep.subr.bf16.mxu0 0
    %428 = vmatpush1.bf16.xpose.msra.mxu0 0
    %429 = vmatprep.subr.bf16.mxu0 0
    %430 = vmatpush1.bf16.xpose.msra.mxu0 0
    %431 = vmatprep.subr.bf16.mxu0 0
    %432 = vmatpush1.bf16.xpose.msra.mxu0 0
    %433 = vmatprep.subr.bf16.mxu0 0
    %434 = vmatpush1.bf16.xpose.msra.mxu0 %v417
    %435 = vmatprep.subr.bf16.mxu0 0
    %436 = vmatpush2.bf16.xpose.msra.mxu0 0
    %437 = vmatprep.subr.bf16.mxu0 0
    %438 = vmatpush2.bf16.xpose.msra.mxu0 0
    %439 = vmatprep.subr.bf16.mxu0 0
    %440 = vmatpush2.bf16.xpose.msra.mxu0 0
    %441 = vmatprep.subr.bf16.mxu0 0
    %442 = vmatpush2.bf16.xpose.msra.mxu0 0
    %443 = vmatprep.subr.bf16.mxu0 0
    %444 = vmatpush2.bf16.xpose.msra.mxu0 0
    %445 = vmatprep.subr.bf16.mxu0 0
    %446 = vmatpush2.bf16.xpose.msra.mxu0 0
    %447 = vmatprep.subr.bf16.mxu0 0
    %448 = vmatpush2.bf16.xpose.msra.mxu0 0
    %449 = vmatprep.subr.bf16.mxu0 0
    %450 = vmatpush2.bf16.xpose.msra.mxu0 0
    %451 = vmatprep.mubr.bf16.mxu0 0
    %452 = vmatmul.mubr.bf16.gmra.mxu0 %v414
    %v453 = vpop.f32.mrf.mxu0
    %v454 = vadd.f32 %v37, %v453
    %v455 = vpop.f32.mrf.mxu0
    %v456 = vpop.f32.mrf.mxu0
    %v457 = vadd.f32 %v38, %v456
    %v458 = vpop.f32.mrf.mxu0
    %459 = vdwg.mxu0
    %v460 = vsel %vm217, %v454, -inf
    %461 = vmax.xlane.f32.xlu0 %v460
    %v462 = vpop.xlane.xlu0 %461
    %v463 = vsel %vm217, %v457, -inf
    %464 = vmax.xlane.f32.xlu0 %v463
    %v465 = vpop.xlane.xlu0 %464
    %v466 = vsub.f32 %v454, %v462
    %v467 = vsub.f32 %v457, %v465
    %v468 = vmul.f32 %v466, 1.442695
    %v469 = vpow.pop %v468
    %v470 = vmul.f32 %v467, 1.442695
    %v471 = vpow.pop %v470
    %v472 = vsel %vm217, %v469, 0.0
    %473 = vadd.xlane.f32.xlu0 %v472
    %v474 = vpop.xlane.xlu0 %473
    %v475 = vsel %vm217, %v471, 0.0
    %476 = vadd.xlane.f32.xlu0 %v475
    %v477 = vpop.xlane.xlu0 %476
    %v478 = vrcp.pop %v474
    %v479 = vrcp.pop %v477
    %v480 = vmul.f32 %v469, %v478
    %v481 = vmul.f32 %v471, %v479
    %v482 = vpack.c.bf16 %v481, %v480
    %483 = vrot.lane.b32.xlu0 %v169, 64
    %v484 = vpop.permute.xlu0 %483
    %v487 = vsel %vm217, %v482, 0
    %489 = vmatprep.subr.bf16.mxu0 0
    %490 = vmatpush1.bf16.msra.mxu0 0
    %491 = vmatprep.subr.bf16.mxu0 0
    %492 = vmatpush1.bf16.msra.mxu0 0
    %493 = vmatprep.subr.bf16.mxu0 0
    %494 = vmatpush1.bf16.msra.mxu0 0
    %495 = vmatprep.subr.bf16.mxu0 0
    %496 = vmatpush1.bf16.msra.mxu0 0
    %497 = vmatprep.subr.bf16.mxu0 0
    %498 = vmatpush1.bf16.msra.mxu0 0
    %499 = vmatprep.subr.bf16.mxu0 0
    %500 = vmatpush1.bf16.msra.mxu0 0
    %501 = vmatprep.subr.bf16.mxu0 0
    %502 = vmatpush1.bf16.msra.mxu0 0
    %503 = vmatprep.subr.bf16.mxu0 0
    %504 = vmatpush1.bf16.msra.mxu0 %v484
    %505 = vmatprep.subr.bf16.mxu0 0
    %506 = vmatpush2.bf16.msra.mxu0 0
    %507 = vmatprep.subr.bf16.mxu0 0
    %508 = vmatpush2.bf16.msra.mxu0 0
    %509 = vmatprep.subr.bf16.mxu0 0
    %510 = vmatpush2.bf16.msra.mxu0 0
    %511 = vmatprep.subr.bf16.mxu0 0
    %512 = vmatpush2.bf16.msra.mxu0 0
    %513 = vmatprep.subr.bf16.mxu0 0
    %514 = vmatpush2.bf16.msra.mxu0 0
    %515 = vmatprep.subr.bf16.mxu0 0
    %516 = vmatpush2.bf16.msra.mxu0 0
    %517 = vmatprep.subr.bf16.mxu0 0
    %518 = vmatpush2.bf16.msra.mxu0 0
    %519 = vmatprep.subr.bf16.mxu0 0
    %520 = vmatpush2.bf16.msra.mxu0 0
    %521 = vmatprep.mubr.bf16.mxu0 0
    %522 = vmatmul.mubr.bf16.gmra.mxu0 %v487
    %v523 = vpop.f32.mrf.mxu0
    %v524 = vadd.f32 0.0, %v523
    %v525 = vpop.f32.mrf.mxu0
    %v526 = vpop.f32.mrf.mxu0
    %v527 = vadd.f32 0.0, %v526
    %v528 = vpop.f32.mrf.mxu0
    %529 = vdwg.mxu0
    %v530 = vadd.f32 %v403, %v524
    %v531 = vadd.f32 %v406, %v527
    %532 = vrot.lane.b32.xlu0 %v167, 32
    %v533 = vpop.permute.xlu0 %532
    %534 = vrot.lane.b32.xlu0 %v168, 32
    %v535 = vpop.permute.xlu0 %534
    %v537 = vsel %vm79, %v533, 0
    %v540 = vsel %vm79, %v535, 0
    %542 = vmatprep.subr.bf16.mxu0 0
    %543 = vmatpush1.bf16.xpose.msra.mxu0 0
    %544 = vmatprep.subr.bf16.mxu0 0
    %545 = vmatpush1.bf16.xpose.msra.mxu0 0
    %546 = vmatprep.subr.bf16.mxu0 0
    %547 = vmatpush1.bf16.xpose.msra.mxu0 0
    %548 = vmatprep.subr.bf16.mxu0 0
    %549 = vmatpush1.bf16.xpose.msra.mxu0 0
    %550 = vmatprep.subr.bf16.mxu0 0
    %551 = vmatpush1.bf16.xpose.msra.mxu0 0
    %552 = vmatprep.subr.bf16.mxu0 0
    %553 = vmatpush1.bf16.xpose.msra.mxu0 0
    %554 = vmatprep.subr.bf16.mxu0 0
    %555 = vmatpush1.bf16.xpose.msra.mxu0 0
    %556 = vmatprep.subr.bf16.mxu0 0
    %557 = vmatpush1.bf16.xpose.msra.mxu0 %v540
    %558 = vmatprep.subr.bf16.mxu0 0
    %559 = vmatpush2.bf16.xpose.msra.mxu0 0
    %560 = vmatprep.subr.bf16.mxu0 0
    %561 = vmatpush2.bf16.xpose.msra.mxu0 0
    %562 = vmatprep.subr.bf16.mxu0 0
    %563 = vmatpush2.bf16.xpose.msra.mxu0 0
    %564 = vmatprep.subr.bf16.mxu0 0
    %565 = vmatpush2.bf16.xpose.msra.mxu0 0
    %566 = vmatprep.subr.bf16.mxu0 0
    %567 = vmatpush2.bf16.xpose.msra.mxu0 0
    %568 = vmatprep.subr.bf16.mxu0 0
    %569 = vmatpush2.bf16.xpose.msra.mxu0 0
    %570 = vmatprep.subr.bf16.mxu0 0
    %571 = vmatpush2.bf16.xpose.msra.mxu0 0
    %572 = vmatprep.subr.bf16.mxu0 0
    %573 = vmatpush2.bf16.xpose.msra.mxu0 0
    %574 = vmatprep.mubr.bf16.mxu0 0
    %575 = vmatmul.mubr.bf16.gmra.mxu0 %v537
    %v576 = vpop.f32.mrf.mxu0
    %v577 = vadd.f32 %v37, %v576
    %v578 = vpop.f32.mrf.mxu0
    %v579 = vpop.f32.mrf.mxu0
    %v580 = vadd.f32 %v38, %v579
    %v581 = vpop.f32.mrf.mxu0
    %582 = vdwg.mxu0
    %v583 = vsel %vm217, %v577, -inf
    %584 = vmax.xlane.f32.xlu0 %v583
    %v585 = vpop.xlane.xlu0 %584
    %v586 = vsel %vm217, %v580, -inf
    %587 = vmax.xlane.f32.xlu0 %v586
    %v588 = vpop.xlane.xlu0 %587
    %v589 = vsub.f32 %v577, %v585
    %v590 = vsub.f32 %v580, %v588
    %v591 = vmul.f32 %v589, 1.442695
    %v592 = vpow.pop %v591
    %v593 = vmul.f32 %v590, 1.442695
    %v594 = vpow.pop %v593
    %v595 = vsel %vm217, %v592, 0.0
    %596 = vadd.xlane.f32.xlu0 %v595
    %v597 = vpop.xlane.xlu0 %596
    %v598 = vsel %vm217, %v594, 0.0
    %599 = vadd.xlane.f32.xlu0 %v598
    %v600 = vpop.xlane.xlu0 %599
    %v601 = vrcp.pop %v597
    %v602 = vrcp.pop %v600
    %v603 = vmul.f32 %v592, %v601
    %v604 = vmul.f32 %v594, %v602
    %v605 = vpack.c.bf16 %v604, %v603
    %606 = vrot.lane.b32.xlu0 %v169, 32
    %v607 = vpop.permute.xlu0 %606
    %v610 = vsel %vm217, %v605, 0
    %612 = vmatprep.subr.bf16.mxu0 0
    %613 = vmatpush1.bf16.msra.mxu0 0
    %614 = vmatprep.subr.bf16.mxu0 0
    %615 = vmatpush1.bf16.msra.mxu0 0
    %616 = vmatprep.subr.bf16.mxu0 0
    %617 = vmatpush1.bf16.msra.mxu0 0
    %618 = vmatprep.subr.bf16.mxu0 0
    %619 = vmatpush1.bf16.msra.mxu0 0
    %620 = vmatprep.subr.bf16.mxu0 0
    %621 = vmatpush1.bf16.msra.mxu0 0
    %622 = vmatprep.subr.bf16.mxu0 0
    %623 = vmatpush1.bf16.msra.mxu0 0
    %624 = vmatprep.subr.bf16.mxu0 0
    %625 = vmatpush1.bf16.msra.mxu0 0
    %626 = vmatprep.subr.bf16.mxu0 0
    %627 = vmatpush1.bf16.msra.mxu0 %v607
    %628 = vmatprep.subr.bf16.mxu0 0
    %629 = vmatpush2.bf16.msra.mxu0 0
    %630 = vmatprep.subr.bf16.mxu0 0
    %631 = vmatpush2.bf16.msra.mxu0 0
    %632 = vmatprep.subr.bf16.mxu0 0
    %633 = vmatpush2.bf16.msra.mxu0 0
    %634 = vmatprep.subr.bf16.mxu0 0
    %635 = vmatpush2.bf16.msra.mxu0 0
    %636 = vmatprep.subr.bf16.mxu0 0
    %637 = vmatpush2.bf16.msra.mxu0 0
    %638 = vmatprep.subr.bf16.mxu0 0
    %639 = vmatpush2.bf16.msra.mxu0 0
    %640 = vmatprep.subr.bf16.mxu0 0
    %641 = vmatpush2.bf16.msra.mxu0 0
    %642 = vmatprep.subr.bf16.mxu0 0
    %643 = vmatpush2.bf16.msra.mxu0 0
    %644 = vmatprep.mubr.bf16.mxu0 0
    %645 = vmatmul.mubr.bf16.gmra.mxu0 %v610
    %v646 = vpop.f32.mrf.mxu0
    %v647 = vadd.f32 0.0, %v646
    %v648 = vpop.f32.mrf.mxu0
    %v649 = vpop.f32.mrf.mxu0
    %v650 = vadd.f32 0.0, %v649
    %v651 = vpop.f32.mrf.mxu0
    %652 = vdwg.mxu0
    %v653 = vadd.f32 %v530, %v647
    %v654 = vadd.f32 %v531, %v650
    %v655 = vlaneseq
    %v656 = vshrl.u32 %v655, 7
    %v657 = vsub.s32 0, %v656
    %v658 = vrot.slane %v36, %v657
    %v659 = vadd.f32 %v653, %v658
    %v660 = vadd.f32 %v654, %v658
    %v661 = vadd.f32 %v659, %v33
    %v662 = vadd.f32 %v660, %v34
    %v663 = vsel %vm79, %v661, 0.0
    %664 = vadd.xlane.f32.xlu0 %v663
    %v665 = vpop.xlane.xlu0 %664
    %v666 = vsel %vm79, %v662, 0.0
    %667 = vadd.xlane.f32.xlu0 %v666
    %v668 = vpop.xlane.xlu0 %667
    %v669 = vrcp.pop 32.0
    %v670 = vmul.f32 %v665, %v669
    %v671 = vmul.f32 %v668, %v669
    %v672 = vsub.f32 %v661, %v670
    %v673 = vsub.f32 %v662, %v671
    %v674 = vmul.f32 %v672, %v672
    %v675 = vmul.f32 %v673, %v673
    %v676 = vsel %vm79, %v674, 0.0
    %677 = vadd.xlane.f32.xlu0 %v676
    %v678 = vpop.xlane.xlu0 %677
    %v679 = vsel %vm79, %v675, 0.0
    %680 = vadd.xlane.f32.xlu0 %v679
    %v681 = vpop.xlane.xlu0 %680
    %v682 = vmul.f32 %v678, %v669
    %v683 = vmul.f32 %v681, %v669
    %v684 = vadd.f32 %v682, 1e-05
    %v685 = vadd.f32 %v683, 1e-05
    %v686 = vrsqrt.pop %v684
    %v687 = vrsqrt.pop %v685
    %v688 = vmul.f32 %v672, %v686
    %v689 = vmul.f32 %v673, %v687
    %v690 = vlaneseq
    %v691 = vshrl.u32 %v690, 7
    %v692 = vsub.s32 1, %v691
    %v693 = vrot.slane %v36, %v692
    %v694 = vmul.f32 %v688, %v693
    %v695 = vmul.f32 %v689, %v693
    %v696 = vlaneseq
    %v697 = vshrl.u32 %v696, 7
    %v698 = vsub.s32 2, %v697
    %v699 = vrot.slane %v36, %v698
    %v700 = vadd.f32 %v694, %v699
    %v701 = vadd.f32 %v695, %v699
    %v702 = vpack.c.bf16 %v689, %v688
    %v703 = vlaneseq
    %v704 = vshrl.u32 %v703, 7
    %v705 = vsub.s32 3, %v704
    %v706 = vrot.slane %v36, %v705
    %v707 = vunpack.c.h.b16 %v40
    %v708 = vunpack.c.h.b16 %v42
    %v709 = vunpack.c.h.b16 %v44
    %v710 = vunpack.c.h.b16 %v46
    %v711 = vpack.c.b16 %v708, %v707
    %v712 = vpack.c.b16 %v710, %v709
    %v716 = vsel %vm79, %v702, 0
    %718 = vmatprep.subr.bf16.mxu0 0
    %719 = vmatpush1.bf16.msra.mxu0 0
    %720 = vmatprep.subr.bf16.mxu0 0
    %721 = vmatpush1.bf16.msra.mxu0 0
    %722 = vmatprep.subr.bf16.mxu0 0
    %723 = vmatpush1.bf16.msra.mxu0 0
    %724 = vmatprep.subr.bf16.mxu0 0
    %725 = vmatpush1.bf16.msra.mxu0 0
    %726 = vmatprep.subr.bf16.mxu0 0
    %727 = vmatpush1.bf16.msra.mxu0 0
    %728 = vmatprep.subr.bf16.mxu0 0
    %729 = vmatpush1.bf16.msra.mxu0 0
    %730 = vmatprep.subr.bf16.mxu0 0
    %731 = vmatpush1.bf16.msra.mxu0 %v712
    %732 = vmatprep.subr.bf16.mxu0 0
    %733 = vmatpush1.bf16.msra.mxu0 %v711
    %734 = vmatprep.subr.bf16.mxu0 0
    %735 = vmatpush2.bf16.msra.mxu0 0
    %736 = vmatprep.subr.bf16.mxu0 0
    %737 = vmatpush2.bf16.msra.mxu0 0
    %738 = vmatprep.subr.bf16.mxu0 0
    %739 = vmatpush2.bf16.msra.mxu0 0
    %740 = vmatprep.subr.bf16.mxu0 0
    %741 = vmatpush2.bf16.msra.mxu0 0
    %742 = vmatprep.subr.bf16.mxu0 0
    %743 = vmatpush2.bf16.msra.mxu0 0
    %744 = vmatprep.subr.bf16.mxu0 0
    %745 = vmatpush2.bf16.msra.mxu0 0
    %746 = vmatprep.subr.bf16.mxu0 0
    %747 = vmatpush2.bf16.msra.mxu0 0
    %748 = vmatprep.subr.bf16.mxu0 0
    %749 = vmatpush2.bf16.msra.mxu0 0
    %750 = vmatprep.mubr.bf16.mxu0 0
    %751 = vmatmul.mubr.bf16.gmra.mxu0 %v716
    %v752 = vpop.f32.mrf.mxu0
    %v753 = vadd.f32 %v706, %v752
    %v754 = vpop.f32.mrf.mxu0
    %v755 = vpop.f32.mrf.mxu0
    %v756 = vadd.f32 %v706, %v755
    %v757 = vpop.f32.mrf.mxu0
    %758 = vdwg.mxu0
    %v759 = vmax.f32 %v753, 0.0
    %v760 = vmax.f32 %v756, 0.0
    %v761 = vpack.c.bf16 %v760, %v759
    %v762 = vld [vmem:[%s2] sm:$0xf]
    %v763 = vld [vmem:[%s2 + $0x4] sm:$0xf]
    %v764 = vld [vmem:[%s2 + $0x8] sm:$0xf]
    %v765 = vld [vmem:[%s2 + $0xc] sm:$0xf]
    %v766 = vld [vmem:[%s2 + $0x10] sm:$0xf]
    %v767 = vld [vmem:[%s2 + $0x14] sm:$0xf]
    %v768 = vld [vmem:[%s2 + $0x18] sm:$0xf]
    %v769 = vld [vmem:[%s2 + $0x1c] sm:$0xf]
    %v770 = vld [vmem:[%s2 + $0x20] sm:$0xf]
    %v771 = vld [vmem:[%s2 + $0x24] sm:$0xf]
    %v772 = vld [vmem:[%s2 + $0x28] sm:$0xf]
    %v773 = vld [vmem:[%s2 + $0x2c] sm:$0xf]
    %v774 = vld [vmem:[%s2 + $0x30] sm:$0xf]
    %v775 = vld [vmem:[%s2 + $0x34] sm:$0xf]
    %v776 = vld [vmem:[%s2 + $0x38] sm:$0xf]
    %v777 = vld [vmem:[%s2 + $0x3c] sm:$0xf]
    %v778 = vlaneseq
    %v779 = vshrl.u32 %v778, 7
    %v780 = vsub.s32 4, %v779
    %v781 = vrot.slane %v36, %v780
    %v798 = vunpack.c.l.b16 %v762
    %v799 = vunpack.c.l.b16 %v763
    %v800 = vunpack.c.l.b16 %v764
    %v801 = vunpack.c.l.b16 %v765
    %v802 = vunpack.c.l.b16 %v766
    %v803 = vunpack.c.l.b16 %v767
    %v804 = vunpack.c.l.b16 %v768
    %v805 = vunpack.c.l.b16 %v769
    %v806 = vunpack.c.l.b16 %v770
    %v807 = vunpack.c.l.b16 %v771
    %v808 = vunpack.c.l.b16 %v772
    %v809 = vunpack.c.l.b16 %v773
    %v810 = vunpack.c.l.b16 %v774
    %v811 = vunpack.c.l.b16 %v775
    %v812 = vunpack.c.l.b16 %v776
    %v813 = vunpack.c.l.b16 %v777
    %v814 = vpack.c.b16 %v799, %v798
    %v815 = vpack.c.b16 %v801, %v800
    %v816 = vpack.c.b16 %v803, %v802
    %v817 = vpack.c.b16 %v805, %v804
    %v818 = vpack.c.b16 %v807, %v806
    %v819 = vpack.c.b16 %v809, %v808
    %v820 = vpack.c.b16 %v811, %v810
    %v821 = vpack.c.b16 %v813, %v812
    %830 = vmatprep.subr.bf16.mxu0 0
    %831 = vmatpush1.bf16.msra.mxu0 %v821
    %832 = vmatprep.subr.bf16.mxu0 0
    %833 = vmatpush1.bf16.msra.mxu0 %v820
    %834 = vmatprep.subr.bf16.mxu0 0
    %835 = vmatpush1.bf16.msra.mxu0 %v819
    %836 = vmatprep.subr.bf16.mxu0 0
    %837 = vmatpush1.bf16.msra.mxu0 %v818
    %838 = vmatprep.subr.bf16.mxu0 0
    %839 = vmatpush1.bf16.msra.mxu0 %v817
    %840 = vmatprep.subr.bf16.mxu0 0
    %841 = vmatpush1.bf16.msra.mxu0 %v816
    %842 = vmatprep.subr.bf16.mxu0 0
    %843 = vmatpush1.bf16.msra.mxu0 %v815
    %844 = vmatprep.subr.bf16.mxu0 0
    %845 = vmatpush1.bf16.msra.mxu0 %v814
    %846 = vmatprep.subr.bf16.mxu0 0
    %847 = vmatpush2.bf16.msra.mxu0 0
    %848 = vmatprep.subr.bf16.mxu0 0
    %849 = vmatpush2.bf16.msra.mxu0 0
    %850 = vmatprep.subr.bf16.mxu0 0
    %851 = vmatpush2.bf16.msra.mxu0 0
    %852 = vmatprep.subr.bf16.mxu0 0
    %853 = vmatpush2.bf16.msra.mxu0 0
    %854 = vmatprep.subr.bf16.mxu0 0
    %855 = vmatpush2.bf16.msra.mxu0 0
    %856 = vmatprep.subr.bf16.mxu0 0
    %857 = vmatpush2.bf16.msra.mxu0 0
    %858 = vmatprep.subr.bf16.mxu0 0
    %859 = vmatpush2.bf16.msra.mxu0 0
    %860 = vmatprep.subr.bf16.mxu0 0
    %861 = vmatpush2.bf16.msra.mxu0 0
    %862 = vmatprep.mubr.bf16.mxu0 0
    %863 = vmatmul.mubr.bf16.gmra.mxu0 %v761
    %v864 = vpop.f32.mrf.mxu0
    %v865 = vadd.f32 %v781, %v864
    %v866 = vpop.f32.mrf.mxu0
    %v867 = vpop.f32.mrf.mxu0
    %v868 = vadd.f32 %v781, %v867
    %v869 = vpop.f32.mrf.mxu0
    %870 = vdwg.mxu0
    %v871 = vadd.f32 %v865, %v700
    %v872 = vadd.f32 %v868, %v701
    %v873 = vsel %vm79, %v871, 0.0
    %874 = vadd.xlane.f32.xlu0 %v873
    %v875 = vpop.xlane.xlu0 %874
    %v876 = vsel %vm79, %v872, 0.0
    %877 = vadd.xlane.f32.xlu0 %v876
    %v878 = vpop.xlane.xlu0 %877
    %v879 = vmul.f32 %v875, %v669
    %v880 = vmul.f32 %v878, %v669
    %v881 = vsub.f32 %v871, %v879
    %v882 = vsub.f32 %v872, %v880
    %v883 = vmul.f32 %v881, %v881
    %v884 = vmul.f32 %v882, %v882
    %v885 = vsel %vm79, %v883, 0.0
    %886 = vadd.xlane.f32.xlu0 %v885
    %v887 = vpop.xlane.xlu0 %886
    %v888 = vsel %vm79, %v884, 0.0
    %889 = vadd.xlane.f32.xlu0 %v888
    %v890 = vpop.xlane.xlu0 %889
    %v891 = vmul.f32 %v887, %v669
    %v892 = vmul.f32 %v890, %v669
    %v893 = vadd.f32 %v891, 1e-05
    %v894 = vadd.f32 %v892, 1e-05
    %v895 = vrsqrt.pop %v893
    %v896 = vrsqrt.pop %v894
    %v897 = vmul.f32 %v881, %v895
    %v898 = vmul.f32 %v882, %v896
    %v899 = vlaneseq
    %v900 = vshrl.u32 %v899, 7
    %v901 = vsub.s32 5, %v900
    %v902 = vrot.slane %v36, %v901
    %v903 = vmul.f32 %v897, %v902
    %v904 = vmul.f32 %v898, %v902
    %v905 = vlaneseq
    %v906 = vshrl.u32 %v905, 7
    %v907 = vsub.s32 6, %v906
    %v908 = vrot.slane %v36, %v907
    %v909 = vadd.f32 %v903, %v908
    %v910 = vadd.f32 %v904, %v908
    %911 = vst.msk [vmem:[#allocation5] sm:$0xff] %vm79, %v909
    %912 = vst.msk [vmem:[#allocation5 + $0x8] sm:$0xff] %vm79, %v910
    // Predicated region
    $region22: #{tpu_custom_call.1} parent=1 // pred_check
      _
    $region23: #{tpu_custom_call.1} parent=1 // pred_check_branch
      %914 = sbr.rel (0) target = $region25
    $region24: #{tpu_custom_call.1} parent=1 // pred_region
      %s916 = ssub.s32 256, 256
      %917 = vsyncadd [#allocation4], %s916
      %s918 = sshll.u32 [#allocation5], 4
      %s919 = int_to_ptr.vmem [resolvable:$true] %s918
      %924 = dma.vmem_to_hbm [thread:$0]  %s919, 256, %s4, [#allocation4], 128, 128, 8
    $region25: #{tpu_custom_call.1} parent=1 // pred_fallthru
      _
    // Predicated region
    $region26: #{tpu_custom_call.1} parent=1 // pred_check
      _
    $region27: #{tpu_custom_call.1} parent=1 // pred_check_branch
      %926 = sbr.rel (0) target = $region29
    $region28: #{tpu_custom_call.1} parent=1 // pred_region
      %927 = dma.done [#allocation4], 256
    $region29: #{tpu_custom_call.1} parent=1 // pred_fallthru
      _
    %928 = vsyncpa [#allocation3], 1
    %929 = vsyncpa [#allocation4], 1

</llo_original>
